<compile_context>
chip_gen: v5e
topology: v5e:2x2
jax: 0.10.0
libtpu: 0.0.40
codegen_flags: <defaults>
</compile_context>

<pallas_src>
import functools

import jax
import jax.numpy as jnp
from jax.experimental import pallas as pl
from jax.experimental.pallas import tpu as pltpu

EPS = 1e-5


def _round_up(x, m):
    return (x + m - 1) // m * m


def _roll_lanes(x, shift, size):
    """np.roll-equivalent lane rotation; shift made non-negative & modular."""
    s = shift % size
    if s == 0:
        return x
    return pltpu.roll(x, s, x.ndim - 1)


def _bn_partial_stats_kernel(x_ref, sum_ref, sq_ref):
    # x_ref: (1, Cin, HWp) one batch element.  Per-batch partial sums are
    # emitted (outputs indexed by n) so the grid axis stays "parallel" instead
    # of a serial resident-accumulator reduction.
    x = x_ref[0].astype(jnp.float32)                       # (Cin, HWp)
    sum_ref[0] = jnp.sum(x, axis=1, keepdims=True)         # (Cin, 1)
    sq_ref[0] = jnp.sum(x * x, axis=1, keepdims=True)


def _bn_conv_relu_kernel(x_ref, s_ref, t_ref, w_ref, b_ref, o_ref, patches_ref,
                         *, H, W, HWp, NB):
    # x_ref: (NB, Cin, HWp) native-dtype activations, spatial flattened on lanes
    # s_ref, t_ref: (Cin, 1) f32 folded BN scale / shift
    # w_ref: (Cout, 9*Cin) bf16   weight[o, (kh*3+kw)*Cin + ci]
    # b_ref: (Cout, 1) f32        conv bias
    # o_ref: (NB, Cout, HWp) f32  channel-major output (lane-dense stores)
    # patches_ref: (9*Cin, NB*HWp) bf16 persistent im2col scratch
    # Loop-invariants hoisted (JAX does not CSE broadcast_in_dim).
    s = s_ref[...]
    t = t_ref[...]
    pos = jax.lax.broadcasted_iota(jnp.int32, (1, HWp), 1)
    col = pos % W
    col_ok_l = col >= 1                                    # dw = -1 valid
    col_ok_r = col <= (W - 2)                              # dw = +1 valid
    row_ok_u = pos >= W                                    # dh = -1 valid
    row_ok_d = pos < (H - 1) * W                           # dh = +1 valid
    zero = jnp.zeros((1, HWp), jnp.bfloat16)

    for b in range(NB):
        # BN as one f32 FMA, cast to bf16 *before* building the taps.
        xn = (x_ref[b].astype(jnp.float32) * s + t).astype(jnp.bfloat16)

        # Column-shifted copies masked once, reused across the three dh taps.
        # pltpu.roll follows np.roll: out[p] = in[p - shift].
        left = jnp.where(col_ok_l, _roll_lanes(xn, 1, HWp), zero)     # xn[p-1]
        right = jnp.where(col_ok_r, _roll_lanes(xn, -1, HWp), zero)   # xn[p+1]
        cols = (left, xn, right)                                      # kw=0,1,2

        taps = []
        for dh in (-1, 0, 1):                                         # kh=0,1,2
            for kw in range(3):
                tap = cols[kw]
                if dh == -1:
                    tap = jnp.where(row_ok_u, _roll_lanes(tap, W, HWp), zero)
                elif dh == 1:
                    tap = jnp.where(row_ok_d, _roll_lanes(tap, -W, HWp), zero)
                taps.append(tap)

        # Full-sublane store at a 128-aligned lane offset into the persistent
        # bf16 im2col scratch.
        patches_ref[:, pl.ds(b * HWp, HWp)] = jnp.concatenate(taps, axis=0)

    # One MXU matmul over all packed batch elements: K = 9*Cin, N = NB*HWp.
    acc = jnp.dot(w_ref[...], patches_ref[...],
                  preferred_element_type=jnp.float32)      # (Cout, NB*HWp) f32
    res = jnp.maximum(acc + b_ref[...], 0.0)               # bias + ReLU, f32
    for b in range(NB):                                    # lane-dense stores
        o_ref[b] = res[:, b * HWp:(b + 1) * HWp]


def _pick_batch_pack(N, Cin, Cout, HWp):
    # Pack batch elements per grid step so the single matmul has a wide N dim
    # and the constant weight / per-step overhead amortize; cap VMEM footprint
    # and unroll length.
    budget = 8 * 1024 * 1024
    per_elem = HWp * (2 * 4 * Cin        # double-buffered x block (<=4 B/elem)
                      + 2 * 4 * Cout     # double-buffered f32 out block
                      + 2 * 9 * Cin)     # bf16 im2col scratch
    nb = int(max(1, min(N, budget // max(per_elem, 1))))
    nb = min(nb, 8)
    while N % nb:
        nb -= 1
    return nb


def conv2d_norm_forward(x_nchw, gamma, beta, w_oihw, bias, *, eps=EPS):
    """PyTorch-equivalent forward: x NCHW, conv weight OIHW -> output NCHW."""
    N, Cin, H, W = x_nchw.shape
    Cout = w_oihw.shape[0]
    HW = H * W
    HWp = _round_up(HW, 128)             # keep output stores lane-dense

    # Channel-major flat layout; x stays in its native dtype in HBM.
    x = x_nchw.reshape(N, Cin, HW)
    if HWp != HW:
        x = jnp.pad(x, ((0, 0), (0, 0), (0, HWp - HW)))   # zeros are stat-neutral

    gamma2 = gamma.reshape(Cin, 1).astype(jnp.float32)
    beta2 = beta.reshape(Cin, 1).astype(jnp.float32)
    bias2 = bias.reshape(Cout, 1).astype(jnp.float32)
    # weight[o, ci, kh, kw] -> w_mat[o, (kh*3+kw)*Cin + ci], bf16 MXU operand.
    w_mat = jnp.transpose(w_oihw, (0, 2, 3, 1)).reshape(Cout, 9 * Cin)
    w_mat = w_mat.astype(jnp.bfloat16)

    # ---- Stage 1: per-batch partial BN stats (parallel grid over N) ----
    psum, psq = pl.pallas_call(
        _bn_partial_stats_kernel,
        grid=(N,),
        in_specs=[pl.BlockSpec((1, Cin, HWp), lambda n: (n, 0, 0))],
        out_specs=(pl.BlockSpec((1, Cin, 1), lambda n: (n, 0, 0)),
                   pl.BlockSpec((1, Cin, 1), lambda n: (n, 0, 0))),
        out_shape=(jax.ShapeDtypeStruct((N, Cin, 1), jnp.float32),
                   jax.ShapeDtypeStruct((N, Cin, 1), jnp.float32)),
        compiler_params=pltpu.CompilerParams(
            dimension_semantics=("parallel",)),
    )(x)

    # Tiny finalize in plain jnp: fold BN into per-channel scale/shift.
    cnt = jnp.float32(N * HW)
    mean = jnp.sum(psum, axis=0) / cnt                     # (Cin, 1)
    ex2 = jnp.sum(psq, axis=0) / cnt
    var = jnp.maximum(ex2 - mean * mean, 0.0)              # guard cancellation
    # TODO(synk): use a shifted/Welford accumulation if inputs have |mean| >> std.
    s = gamma2 * jax.lax.rsqrt(var + eps)
    t = beta2 - mean * s

    # ---- Stage 2: BN apply + 3x3 conv (single MXU matmul) + bias + ReLU ----
    NB = _pick_batch_pack(N, Cin, Cout, HWp)
    conv_kernel = functools.partial(_bn_conv_relu_kernel,
                                    H=H, W=W, HWp=HWp, NB=NB)
    out = pl.pallas_call(
        conv_kernel,
        grid=(N // NB,),
        in_specs=[
            pl.BlockSpec((NB, Cin, HWp), lambda n: (n, 0, 0)),    # x
            pl.BlockSpec((Cin, 1), lambda n: (0, 0)),             # BN scale
            pl.BlockSpec((Cin, 1), lambda n: (0, 0)),             # BN shift
            pl.BlockSpec((Cout, 9 * Cin), lambda n: (0, 0)),      # conv weight
            pl.BlockSpec((Cout, 1), lambda n: (0, 0)),            # conv bias
        ],
        out_specs=pl.BlockSpec((NB, Cout, HWp), lambda n: (n, 0, 0)),
        out_shape=jax.ShapeDtypeStruct((N, Cout, HWp), jnp.float32),
        scratch_shapes=[pltpu.VMEM((9 * Cin, NB * HWp), jnp.bfloat16)],
        compiler_params=pltpu.CompilerParams(
            dimension_semantics=("parallel",)),
    )(x, s, t, w_mat, bias2)

    if HWp != HW:
        out = out[:, :, :HW]
    return out.reshape(N, Cout, H, W)                      # already NCHW


def _reference(x_nchw, gamma, beta, w_oihw, bias):
    """Plain-JAX f32 reference matching the PyTorch module's forward."""
    mean = jnp.mean(x_nchw, axis=(0, 2, 3), keepdims=True)
    var = jnp.mean((x_nchw - mean) ** 2, axis=(0, 2, 3), keepdims=True)
    xn = (x_nchw - mean) / jnp.sqrt(var + EPS)
    xn = xn * gamma.reshape(1, -1, 1, 1) + beta.reshape(1, -1, 1, 1)
    y = jax.lax.conv_general_dilated(
        xn, w_oihw, window_strides=(1, 1), padding=((1, 1), (1, 1)),
        dimension_numbers=("NCHW", "OIHW", "NCHW"))
    y = y + bias.reshape(1, -1, 1, 1)
    return jnp.maximum(y, 0.0)


if __name__ == "__main__":
    N, Cin, Cout, H, W = 2, 4, 8, 16, 16

    key = jax.random.PRNGKey(0)
    k1, k2, k3, k4, k5 = jax.random.split(key, 5)
    x = jax.random.normal(k1, (N, Cin, H, W), jnp.float32)
    w = 0.1 * jax.random.normal(k2, (Cout, Cin, 3, 3), jnp.float32)  # Conv2d.weight
    b = 0.1 * jax.random.normal(k3, (Cout,), jnp.float32)            # Conv2d.bias
    gamma = 1.0 + 0.1 * jax.random.normal(k4, (Cin,), jnp.float32)   # BN weight
    beta = 0.1 * jax.random.normal(k5, (Cin,), jnp.float32)          # BN bias

    out = conv2d_norm_forward(x, gamma, beta, w, b)
    out = jax.block_until_ready(out)

    ref = _reference(x, gamma, beta, w, b)
    assert out.shape == (N, Cout, H, W), out.shape
    # Tolerance accounts for bf16 MXU operands (f32 accumulation); BN stats,
    # normalize, bias and ReLU are f32.
    err = float(jnp.max(jnp.abs(out - ref)))
    assert jnp.allclose(out, ref, atol=2e-2, rtol=2e-2), f"max abs err {err}"
    print("KERNEL_OK")
</pallas_src>

<mosaic_0001>
module attributes {stable_mosaic.version = 11 : i64} {
  func.func @_bn_partial_stats_kernel(%arg0: i32, %arg1: memref<1x4x256xf32, #tpu.memory_space<vmem>>, %arg2: memref<1x4x1xf32, #tpu.memory_space<vmem>>, %arg3: memref<1x4x1xf32, #tpu.memory_space<vmem>>) attributes {dimension_semantics = [#tpu.dimension_semantics<parallel>], iteration_bounds = array<i64: 2>, scalar_prefetch = 0 : i64, scratch_operands = 0 : i64, tpu.core_type = #tpu.core_type<tc>, window_params = [{transform_indices = @transform_0, window_bounds = array<i64: 1, 4, 256>}, {transform_indices = @transform_1, window_bounds = array<i64: 1, 4, 1>}, {transform_indices = @transform_2, window_bounds = array<i64: 1, 4, 1>}]} {
    %c0 = arith.constant 0 : index
    %c0_0 = arith.constant 0 : index
    %c0_1 = arith.constant 0 : index
    %0 = vector.load %arg1[%c0, %c0_0, %c0_1] : memref<1x4x256xf32, #tpu.memory_space<vmem>>, vector<1x4x256xf32>
    %1 = vector.shape_cast %0 : vector<1x4x256xf32> to vector<4x256xf32>
    %cst = arith.constant dense<0.000000e+00> : vector<4xf32>
    %2 = vector.multi_reduction <add>, %1, %cst [1] : vector<4x256xf32> to vector<4xf32>
    %3 = vector.shape_cast %2 : vector<4xf32> to vector<4x1xf32>
    %c0_2 = arith.constant 0 : index
    %c0_3 = arith.constant 0 : index
    %c0_4 = arith.constant 0 : index
    %4 = vector.load %arg2[%c0_2, %c0_3, %c0_4] : memref<1x4x1xf32, #tpu.memory_space<vmem>>, vector<1x4x1xf32>
    %5 = vector.shape_cast %4 : vector<1x4x1xf32> to vector<4x1xf32>
    %6 = vector.shape_cast %3 : vector<4x1xf32> to vector<1x4x1xf32>
    tpu.vector_store %arg2[%c0_2, %c0_3, %c0_4], %6 {strides = array<i32>} : memref<1x4x1xf32, #tpu.memory_space<vmem>>, vector<1x4x1xf32>,
    %7 = arith.mulf %1, %1 : vector<4x256xf32>
    %cst_5 = arith.constant dense<0.000000e+00> : vector<4xf32>
    %8 = vector.multi_reduction <add>, %7, %cst_5 [1] : vector<4x256xf32> to vector<4xf32>
    %9 = vector.shape_cast %8 : vector<4xf32> to vector<4x1xf32>
    %c0_6 = arith.constant 0 : index
    %c0_7 = arith.constant 0 : index
    %c0_8 = arith.constant 0 : index
    %10 = vector.load %arg3[%c0_6, %c0_7, %c0_8] : memref<1x4x1xf32, #tpu.memory_space<vmem>>, vector<1x4x1xf32>
    %11 = vector.shape_cast %10 : vector<1x4x1xf32> to vector<4x1xf32>
    %12 = vector.shape_cast %9 : vector<4x1xf32> to vector<1x4x1xf32>
    tpu.vector_store %arg3[%c0_6, %c0_7, %c0_8], %12 {strides = array<i32>} : memref<1x4x1xf32, #tpu.memory_space<vmem>>, vector<1x4x1xf32>,
    return
  }
  func.func @transform_0(%arg0: i32) -> (i32, i32, i32) {
    %c0_i32 = arith.constant 0 : i32
    %c0_i32_0 = arith.constant 0 : i32
    %c0_i32_1 = arith.constant 0 : i32
    return %arg0, %c0_i32, %c0_i32_0 : i32, i32, i32
  }
  func.func @transform_1(%arg0: i32) -> (i32, i32, i32) {
    %c0_i32 = arith.constant 0 : i32
    %c0_i32_0 = arith.constant 0 : i32
    %c0_i32_1 = arith.constant 0 : i32
    return %arg0, %c0_i32, %c0_i32_0 : i32, i32, i32
  }
  func.func @transform_2(%arg0: i32) -> (i32, i32, i32) {
    %c0_i32 = arith.constant 0 : i32
    %c0_i32_0 = arith.constant 0 : i32
    %c0_i32_1 = arith.constant 0 : i32
    return %arg0, %c0_i32, %c0_i32_0 : i32, i32, i32
  }
}

</mosaic_0001>

<llo_original>
// kernel: tpu_custom_call.1
$region0: #{tpu_custom_call.1}
  #allocation0 [shape = 'u32[]', space=smem, size = 0x4, offset = 0x4, fixed_abs, tag = 'smem constant byte address 0x4 - core index']
  #allocation1 [shape = 'u32[72,128]{1,0:T(1,128)}', space=vmem, size = 0x9000, scoped, tag = 'internal scratch']
  %s0 = inlined_call_operand.hbm [shape: f32[2,4,256], index: 0, kind: input, shape index: {}]
  %s1 = inlined_call_operand.vmem [shape: f32[2,4,1], index: 1, kind: output, shape index: {0}]
  %s2 = inlined_call_operand.vmem [shape: f32[2,4,1], index: 2, kind: output, shape index: {1}]
  %3 = xla_tuple %s1, %s2
  %s4 = sld [smem:[#allocation0]]
  $region49: #{tpu_custom_call.1} parent=0
    _
  %s6 = ssub.s32 1, %s4
  %s7 = scalar_select 0, %s6, %s4
  $region1: #{tpu_custom_call.1} parent=0
    #allocation2 [shape = 'u8[8192]{0}', space=vmem, size = 0x2000, scoped, tag = 'input window, operand 0']
    #allocation3 [shape = 's32[2]{0}', space=sflag, size = 0x8, scoped, tag = 'scoped memory for tpu_custom_call.1']
    %8 = vsyncpa [#allocation3], 0
    %s9 = scalar_lea.sflag [#allocation3], 1
    %10 = vsyncpa %s9, 0
    loop: start=0, step=1, limit=4
    $region2: #{tpu_custom_call.1} parent=1 // loop_pre_header
      _
    $region3: #{tpu_custom_call.1} parent=1 // loop_header
      %s12 = sphi 0, %s16
      %p13 = scmp.ge.s32.totalorder %s12, 4
      %s22 = sphi 0, %s24
      %s25 = sphi 0, %s22
      %s26 = sphi 0, %s25
      %s42 = sphi 0, %s26
      %s48 = sphi 0, %s50
      %s51 = sphi 0, %s48
      %s52 = sphi 0, %s51
      %s68 = sphi 0, %s52
      %s74 = sphi 0, %s76
      %s77 = sphi 0, %s74
      %s78 = sphi 0, %s77
      %s94 = sphi 0, %s78
    $region4: #{tpu_custom_call.1} parent=1 // loop_header_branch
      %15 = sbr.rel (%p13) target = $region8
    $region5: #{tpu_custom_call.1} parent=1 // loop_body
      %s17 = ssub.s32 %s12, 1
      %s18 = ssub.s32 %s12, 2
      %s19 = sadd.s32 %s12, 1
      %s20 = ssub.s32 %s12, %s19
      %p21 = scmp.eq.s32.totalorder %s20, 0
      %s23 = sadd.s32 %s22, 1
      %s24 = scalar_select %p21, %s22, %s23
      %p27 = pneg %p21
      %p28 = scmp.eq.s32.totalorder %s12, 1
      %p29 = por %p27, %p28
      %p30 = scmp.ne.s32.totalorder %s22, %s25
      %p31 = scmp.eq.s32.totalorder %s12, 0
      %p32 = por %p30, %p31
      %p33 = scmp.ne.s32.totalorder %s22, %s25
      %p34 = scmp.eq.s32.totalorder %s17, 1
      %p35 = por %p33, %p34
      %p36 = scmp.ne.s32.totalorder %s25, %s26
      %p37 = scmp.eq.s32.totalorder %s17, 0
      %p38 = por %p36, %p37
      %p39 = scmp.ne.s32.totalorder %s25, %s26
      %p40 = scmp.eq.s32.totalorder %s18, 1
      %p41 = por %p39, %p40
      %p43 = scmp.ne.s32.totalorder %s26, %s42
      %p44 = scmp.eq.s32.totalorder %s18, 0
      %p45 = por %p43, %p44
      %s46 = ssub.s32 %s12, %s19
      %p47 = scmp.eq.s32.totalorder %s46, 0
      %s49 = sadd.s32 %s48, 1
      %s50 = scalar_select %p47, %s48, %s49
      %p53 = pneg %p47
      %p54 = scmp.eq.s32.totalorder %s12, 1
      %p55 = por %p53, %p54
      %p56 = scmp.ne.s32.totalorder %s48, %s51
      %p57 = scmp.eq.s32.totalorder %s12, 0
      %p58 = por %p56, %p57
      %p59 = scmp.ne.s32.totalorder %s48, %s51
      %p60 = scmp.eq.s32.totalorder %s17, 1
      %p61 = por %p59, %p60
      %p62 = scmp.ne.s32.totalorder %s51, %s52
      %p63 = scmp.eq.s32.totalorder %s17, 0
      %p64 = por %p62, %p63
      %p65 = scmp.ne.s32.totalorder %s51, %s52
      %p66 = scmp.eq.s32.totalorder %s18, 1
      %p67 = por %p65, %p66
      %p69 = scmp.ne.s32.totalorder %s52, %s68
      %p70 = scmp.eq.s32.totalorder %s18, 0
      %p71 = por %p69, %p70
      %s72 = ssub.s32 %s12, %s19
      %p73 = scmp.eq.s32.totalorder %s72, 0
      %s75 = sadd.s32 %s74, 1
      %s76 = scalar_select %p73, %s74, %s75
      %p79 = pneg %p73
      %p80 = scmp.eq.s32.totalorder %s12, 1
      %p81 = por %p79, %p80
      %p82 = scmp.ne.s32.totalorder %s74, %s77
      %p83 = scmp.eq.s32.totalorder %s12, 0
      %p84 = por %p82, %p83
      %p85 = scmp.ne.s32.totalorder %s74, %s77
      %p86 = scmp.eq.s32.totalorder %s17, 1
      %p87 = por %p85, %p86
      %p88 = scmp.ne.s32.totalorder %s77, %s78
      %p89 = scmp.eq.s32.totalorder %s17, 0
      %p90 = por %p88, %p89
      %p91 = scmp.ne.s32.totalorder %s77, %s78
      %p92 = scmp.eq.s32.totalorder %s18, 1
      %p93 = por %p91, %p92
      %p95 = scmp.ne.s32.totalorder %s78, %s94
      %p96 = scmp.eq.s32.totalorder %s18, 0
      %p97 = por %p95, %p96
      %p98 = scmp.le.s32.totalorder 1, %s12
      %p99 = scmp.lt.s32.totalorder %s12, 3
      %p100 = pnand %p98, %p99
      %p101 = pneg %p100
      // Predicated region
      $region9: #{tpu_custom_call.1} parent=5 // pred_check
        _
      $region10: #{tpu_custom_call.1} parent=5 // pred_check_branch
        %103 = sbr.rel (%p100) target = $region12
      $region11: #{tpu_custom_call.1} parent=5 // pred_region
        %s104 = ssub.s32 %s12, 1
      $region12: #{tpu_custom_call.1} parent=5 // pred_fallthru
        _
      %p105 = scmp.lt.s32.totalorder %s12, 2
      // Predicated region
      $region13: #{tpu_custom_call.1} parent=5 // pred_check
        %p106 = pneg %p105
      $region14: #{tpu_custom_call.1} parent=5 // pred_check_branch
        %108 = sbr.rel (%p106) target = $region16
      $region15: #{tpu_custom_call.1} parent=5 // pred_region
        // Predicated region
        $region17: #{tpu_custom_call.1} parent=15 // pred_check
          %p109 = pneg %p32
        $region18: #{tpu_custom_call.1} parent=15 // pred_check_branch
          %111 = sbr.rel (%p109) target = $region20
        $region19: #{tpu_custom_call.1} parent=15 // pred_region
          %s112 = sand.u32 %s22, 1
          %s113 = scalar_lea.sflag [#allocation3], %s112
          %s114 = sand.u32 %s22, 1
          %s115 = smul.addr %s114, 8
          %s116 = scalar_lea.vmem [#allocation2], %s115
          %118 = vsyncadd %s113, 0
          %s119 = smul.addr %s12, 2
          %s120 = smul.addr %s119, 4
          %s121 = scalar_lea.hbm %s0, %s120
          %s123 = sshll.u32 %s121, 4
          %s124 = int_to_ptr.hbm [resolvable:$true] %s123
          %s125 = sshll.u32 %s116, 4
          %s126 = int_to_ptr.vmem [resolvable:$true] %s125
          %128 = dma.hbm_to_vmem [thread:$0]  %s124, 128, %s126, %s113
        $region20: #{tpu_custom_call.1} parent=15 // pred_fallthru
          _
      $region16: #{tpu_custom_call.1} parent=5 // pred_fallthru
        _
      %p129 = scmp.le.s32.totalorder 1, %s12
      %p130 = scmp.lt.s32.totalorder %s12, 3
      %p131 = pnand %p129, %p130
      %p132 = pneg %p131
      // Predicated region
      $region21: #{tpu_custom_call.1} parent=5 // pred_check
        _
      $region22: #{tpu_custom_call.1} parent=5 // pred_check_branch
        %134 = sbr.rel (%p131) target = $region24
      $region23: #{tpu_custom_call.1} parent=5 // pred_region
        %s135 = ssub.s32 %s12, 1
        %s136 = sand.u32 %s25, 1
        %s137 = scalar_lea.sflag [#allocation3], %s136
        %s138 = sand.u32 %s25, 1
        %s139 = smul.addr %s138, 8
        %s140 = scalar_lea.vmem [#allocation2], %s139
        // Predicated region
        $region25: #{tpu_custom_call.1} parent=23 // pred_check
          %p141 = pneg %p38
        $region26: #{tpu_custom_call.1} parent=23 // pred_check_branch
          %143 = sbr.rel (%p141) target = $region28
        $region27: #{tpu_custom_call.1} parent=23 // pred_region
          %145 = dma.done %s137, 128
        $region28: #{tpu_custom_call.1} parent=23 // pred_fallthru
          _
        %s146 = sand.u32 %s25, 1
        %s147 = scalar_lea.sflag [#allocation3], %s146
        %s148 = sand.u32 %s25, 1
        %s149 = smul.addr %s148, 8
        %s150 = scalar_lea.vmem [#allocation2], %s149
        %p151 = pneg %p38
        %p152 = pneg %p35
        %p153 = pneg %p64
        %p154 = pneg %p61
        %p155 = scmp.lt.s32.totalorder %s17, 1
        %s156 = scalar_select %p155, %s17, 1
        %s157 = smul.addr %s156, 4
        %s158 = scalar_lea.vmem %s1, %s157
        %p159 = pneg %p90
        %p160 = pneg %p87
        %p161 = scmp.lt.s32.totalorder %s17, 1
        %s162 = scalar_select %p161, %s17, 1
        %s163 = smul.addr %s162, 4
        %s164 = scalar_lea.vmem %s2, %s163
        %p165 = scmp.lt.s32.totalorder %s17, 1
        %s166 = scalar_select %p165, %s17, 1
        %s167 = smul.addr %s166, 4
        %s168 = scalar_lea.vmem %s1, %s167
        %p169 = scmp.lt.s32.totalorder %s17, 1
        %s170 = scalar_select %p169, %s17, 1
        %s171 = smul.addr %s170, 4
        %s172 = scalar_lea.vmem %s2, %s171
        %v173 = vld [vmem:[%s140] sm:$0xff]
        %175 = vst [vmem:[#allocation1] ss:$2 sm:$0xff] %v173
        %v176 = vld.sshfl [vmem:[#allocation1] sm:$0xff pattern:$0x75316420]
        %v177 = vld.sshfl [vmem:[#allocation1 + $0x8] sm:$0xff pattern:$0x75316420]
        %vm180 = vcmask 1043456
        %v181 = vsel %vm180, %v176, 0.0
        %v182 = vsel %vm180, %v177, 0.0
        %v183 = vadd.f32 %v181, %v182
        %184 = vadd.xlane.f32.xlu0 %v183
        %v185 = vpop.xlane.xlu0 %184
        %vm186 = vcmask 3072
        %187 = vst.msk [vmem:[%s168] sm:$0xf] %vm186, %v185
        %v188 = vmul.f32 %v173, %v173
        %190 = vst [vmem:[#allocation1] ss:$2 sm:$0xff] %v188
        %v191 = vld.sshfl [vmem:[#allocation1] sm:$0xff pattern:$0x75316420]
        %v192 = vld.sshfl [vmem:[#allocation1 + $0x8] sm:$0xff pattern:$0x75316420]
        %v195 = vsel %vm180, %v191, 0.0
        %v196 = vsel %vm180, %v192, 0.0
        %v197 = vadd.f32 %v195, %v196
        %198 = vadd.xlane.f32.xlu0 %v197
        %v199 = vpop.xlane.xlu0 %198
        %200 = vst.msk [vmem:[%s172] sm:$0xf] %vm186, %v199
        %p201 = scmp.lt.s32.totalorder %s17, 1
        %s202 = scalar_select %p201, %s17, 1
        %s203 = smul.addr %s202, 4
        %s204 = scalar_lea.vmem %s1, %s203
        %p205 = scmp.lt.s32.totalorder %s17, 1
        %s206 = scalar_select %p205, %s17, 1
        %s207 = smul.addr %s206, 4
        %s208 = scalar_lea.vmem %s2, %s207
        // Predicated region
        $region29: #{tpu_custom_call.1} parent=23 // pred_check
          %p209 = pneg %p61
        $region30: #{tpu_custom_call.1} parent=23 // pred_check_branch
          %211 = sbr.rel (%p209) target = $region32
        $region31: #{tpu_custom_call.1} parent=23 // pred_region
          _
        $region32: #{tpu_custom_call.1} parent=23 // pred_fallthru
          _
        // Predicated region
        $region33: #{tpu_custom_call.1} parent=23 // pred_check
          %p212 = pneg %p87
        $region34: #{tpu_custom_call.1} parent=23 // pred_check_branch
          %214 = sbr.rel (%p212) target = $region36
        $region35: #{tpu_custom_call.1} parent=23 // pred_region
          _
        $region36: #{tpu_custom_call.1} parent=23 // pred_fallthru
          _
      $region24: #{tpu_custom_call.1} parent=5 // pred_fallthru
        _
      %p215 = scmp.le.s32.totalorder 2, %s12
      // Predicated region
      $region37: #{tpu_custom_call.1} parent=5 // pred_check
        %p216 = pneg %p215
      $region38: #{tpu_custom_call.1} parent=5 // pred_check_branch
        %218 = sbr.rel (%p216) target = $region40
      $region39: #{tpu_custom_call.1} parent=5 // pred_region
        %s219 = ssub.s32 %s12, 2
        // Predicated region
        $region41: #{tpu_custom_call.1} parent=39 // pred_check
          %p220 = pneg %p67
        $region42: #{tpu_custom_call.1} parent=39 // pred_check_branch
          %222 = sbr.rel (%p220) target = $region44
        $region43: #{tpu_custom_call.1} parent=39 // pred_region
          %p223 = scmp.lt.s32.totalorder %s18, 1
          %s224 = scalar_select %p223, %s18, 1
          %s225 = smul.addr %s224, 4
          %s226 = scalar_lea.vmem %s1, %s225
        $region44: #{tpu_custom_call.1} parent=39 // pred_fallthru
          _
        // Predicated region
        $region45: #{tpu_custom_call.1} parent=39 // pred_check
          %p227 = pneg %p93
        $region46: #{tpu_custom_call.1} parent=39 // pred_check_branch
          %229 = sbr.rel (%p227) target = $region48
        $region47: #{tpu_custom_call.1} parent=39 // pred_region
          %p230 = scmp.lt.s32.totalorder %s18, 1
          %s231 = scalar_select %p230, %s18, 1
          %s232 = smul.addr %s231, 4
          %s233 = scalar_lea.vmem %s2, %s232
        $region48: #{tpu_custom_call.1} parent=39 // pred_fallthru
          _
      $region40: #{tpu_custom_call.1} parent=5 // pred_fallthru
        _
    $region6: #{tpu_custom_call.1} parent=1 // loop_footer
      %s16 = sadd.s32 1, %s12
    $region7: #{tpu_custom_call.1} parent=1 // loop_footer_branch
      %11 = sbr.rel target = $region3
    $region8: #{tpu_custom_call.1} parent=1 // loop_exit
      _
    %234 = vsyncpa [#allocation3], 1
    %s235 = scalar_lea.sflag [#allocation3], 1
    %236 = vsyncpa %s235, 1

</llo_original>
